<compile_context>
chip_gen: v5e
topology: v5e:2x2
jax: 0.10.0
libtpu: 0.0.40
codegen_flags: <defaults>
</compile_context>

<pallas_src>
import functools
import re

import jax
import jax.numpy as jnp
from jax.experimental import pallas as pl
from jax.experimental.pallas import tpu as pltpu

# ----- synthetic "config" -----
CORE_ORIGINAL_GOAL_SIZE = 4
TIMEFEAT = 1
BLIND = True
HRL_GOAL_SIZE = 4
LL_STATE_SIZE = 8

ACTION_SIZE = 4
HIDDEN = 32
CORE_STATE = 12  # raw state features between the leading 3 and the trailing goal+time

_PALLAS_MIN_BATCH = 128   # below this, custom-call overhead > all the work
_MAX_TILE = 32768         # lane-axis batch tile cap (tiles stay << 64 MiB on v7x)


@functools.lru_cache(maxsize=1)
def _bf16_eup_ok():
    """True on TPU generations (>= v6) whose VPU/EUP have a native bf16 path."""
    try:
        kind = jax.devices()[0].device_kind
    except Exception:  # pragma: no cover - non-TPU fallback
        return False
    m = re.search(r"(\d+)", kind)
    return bool(m) and int(m.group(1)) >= 6


def actor_kernel(xt_ref, w1t_ref, b1_ref, w2t_ref, b2_ref, scale_ref, out_ref,
                 *, bf16_tanh):
    """Transposed MLP tile: xT [D_in, TB] -> [mean; scale]T [2A, TB] (batch on lanes)."""
    xt = xt_ref[...]                                                    # [D_in, TB]
    # layer 1: [H, D_in] @ [D_in, TB] -> [H, TB], f32 accumulation on the MXU
    h = jnp.dot(w1t_ref[...], xt, preferred_element_type=jnp.float32) + b1_ref[...]
    if bf16_tanh:
        # v6e/v7x: bf16 EUP tanh halves the transcendental cost (binding slot on v7x).
        h = jnp.tanh(h.astype(jnp.bfloat16))
    else:
        # v5e (no bf16 VPU/EUP): keep the activation in f32.
        h = jnp.tanh(h)
    h = h.astype(w2t_ref.dtype)
    # layer 2: [A, H] @ [H, TB] -> [A, TB]
    m = jnp.dot(w2t_ref[...], h, preferred_element_type=jnp.float32) + b2_ref[...]
    mean = jnp.tanh(m)                                                  # f_mean_clip, f32
    tb = out_ref.shape[1]
    scale_rows = jnp.broadcast_to(scale_ref[...], (scale_ref.shape[0], tb))
    # single lane-dense, full-(8,128)-tile store: rows 0..A = mean, rows A..2A = scale
    out_ref[...] = jnp.concatenate([mean, scale_rows], axis=0)


def _batch_tiling(b):
    """Lane-axis batch tile (multiple of 128) + padded batch; >= 2 grid steps if B > 128."""
    cap_blocks = _MAX_TILE // 128
    n_blk = max(1, pl.cdiv(b, 128))
    if n_blk == 1:
        tb = 128
    else:
        # at least 2 steps so the "parallel" axis shards across v7x's two TensorCores,
        # and enough steps that every tile stays under the cap (minimal padding waste).
        n_steps = max(2, pl.cdiv(n_blk, cap_blocks))
        tb = 128 * pl.cdiv(n_blk, n_steps)
    b_pad = tb * pl.cdiv(b, tb)
    return tb, b_pad


@functools.partial(jax.jit, static_argnames=("input_dtype", "bf16_tanh", "force_pallas"))
def actor_forward(goals, states, params, *, input_dtype=jnp.bfloat16,
                  bf16_tanh=None, force_pallas=False):
    assert goals.dtype == jnp.float32
    # ibottleneck is None -> identity
    goal = goals
    state = states[:, 3:states.shape[1] - CORE_ORIGINAL_GOAL_SIZE - TIMEFEAT]
    if BLIND and HRL_GOAL_SIZE == goal.shape[-1]:
        state = state[:, :LL_STATE_SIZE]

    w1, b1, w2, b2, log_std = (
        params["w1"], params["b1"], params["w2"], params["b2"], params["log_std"]
    )
    B = goal.shape[0]
    d_in = goal.shape[1] + state.shape[1]
    H = w1.shape[1]
    A = w2.shape[1]

    # PPOHead scale: batch-constant, kept in f32 end-to-end
    scale = jnp.exp(jnp.clip(log_std, -5.0, 2.0))                       # [1, A]

    if B < _PALLAS_MIN_BATCH and not force_pallas:
        # tiny batch: not worth a custom call
        x = jnp.concatenate([goal, state], axis=1)
        h = jnp.tanh(x @ w1 + b1)
        mean = jnp.tanh(h @ w2 + b2)
        return jnp.concatenate([mean, jnp.broadcast_to(scale, (B, A))], axis=1)

    if bf16_tanh is None:
        bf16_tanh = (jnp.dtype(input_dtype) == jnp.dtype(jnp.bfloat16)) and _bf16_eup_ok()

    tb, b_pad = _batch_tiling(B)

    # --- transposed operands (batch on the lane axis; no [B,D] concat/pad/transpose chain) ---
    xt = jnp.concatenate([goal.T, state.T], axis=0).astype(input_dtype)  # [D_in, B]
    if b_pad != B:
        xt = jnp.pad(xt, ((0, 0), (0, b_pad - B)))                       # [D_in, B_pad]
    w1t = w1.T.astype(input_dtype)                                       # [H, D_in]
    w2t = w2.T.astype(input_dtype)                                       # [A, H]
    b1t = b1.T                                                           # [H, 1] f32
    b2t = b2.T                                                           # [A, 1] f32
    scale_t = scale.T                                                    # [A, 1] f32

    # right-sized VMEM budget: double-buffered xt/out tiles + resident weights + headroom
    in_item = jnp.dtype(input_dtype).itemsize
    tile_bytes = tb * (d_in * in_item + 2 * A * 4) * 2
    weight_bytes = 2 * ((H * d_in + A * H) * in_item + (H + 2 * A) * 4)
    vmem_limit = min(int(tile_bytes + weight_bytes) + (4 << 20), 60 << 20)

    kernel = functools.partial(actor_kernel, bf16_tanh=bool(bf16_tanh))
    out_t = pl.pallas_call(
        kernel,
        out_shape=jax.ShapeDtypeStruct((2 * A, b_pad), jnp.float32),
        grid=(b_pad // tb,),
        in_specs=[
            pl.BlockSpec((d_in, tb), lambda i: (0, i)),   # x tile: batch on lanes
            pl.BlockSpec((H, d_in), lambda i: (0, 0)),    # weights/biases/scale resident
            pl.BlockSpec((H, 1), lambda i: (0, 0)),
            pl.BlockSpec((A, H), lambda i: (0, 0)),
            pl.BlockSpec((A, 1), lambda i: (0, 0)),
            pl.BlockSpec((A, 1), lambda i: (0, 0)),
        ],
        out_specs=pl.BlockSpec((2 * A, tb), lambda i: (0, i)),
        compiler_params=pltpu.CompilerParams(
            dimension_semantics=("parallel",),            # shards batch grid on v7x 2-TC
            vmem_limit_bytes=vmem_limit,
        ),
    )(xt, w1t, b1t, w2t, b2t, scale_t)

    # kernel already holds [mean; scale]; just drop padding and transpose once
    return out_t[:, :B].T                                                # [B, 2A]


def init_params(key):
    """Deterministic PyTorch-Linear-style init (uniform +/- 1/sqrt(fan_in))."""
    d_in = HRL_GOAL_SIZE + LL_STATE_SIZE
    k1, k2, k3, k4 = jax.random.split(key, 4)
    lim1 = 1.0 / jnp.sqrt(d_in)
    lim2 = 1.0 / jnp.sqrt(HIDDEN)
    return {
        "w1": jax.random.uniform(k1, (d_in, HIDDEN), jnp.float32, -lim1, lim1),
        "b1": jax.random.uniform(k2, (1, HIDDEN), jnp.float32, -lim1, lim1),
        "w2": jax.random.uniform(k3, (HIDDEN, ACTION_SIZE), jnp.float32, -lim2, lim2),
        "b2": jax.random.uniform(k4, (1, ACTION_SIZE), jnp.float32, -lim2, lim2),
        "log_std": jnp.full((1, ACTION_SIZE), -0.5, dtype=jnp.float32),
    }


def reference_forward(goals, states, params):
    """Pure-JAX reference for correctness checks."""
    goal = goals
    state = states[:, 3:states.shape[1] - CORE_ORIGINAL_GOAL_SIZE - TIMEFEAT]
    if BLIND and HRL_GOAL_SIZE == goal.shape[-1]:
        state = state[:, :LL_STATE_SIZE]
    x = jnp.concatenate([goal, state], axis=1)
    h = jnp.tanh(x @ params["w1"] + params["b1"])
    mean = jnp.tanh(h @ params["w2"] + params["b2"])
    scale = jnp.exp(jnp.clip(params["log_std"], -5.0, 2.0))
    return jnp.concatenate([mean, jnp.broadcast_to(scale, mean.shape)], axis=1)


if __name__ == "__main__":
    key = jax.random.PRNGKey(0)
    k_p, k_g, k_s = jax.random.split(key, 3)
    params = init_params(k_p)

    STATE_DIM = 3 + CORE_STATE + CORE_ORIGINAL_GOAL_SIZE + TIMEFEAT  # 20

    # --- small demo batch (force the Pallas path; strict f32 operands) ---
    B = 2
    goals = jax.random.normal(k_g, (B, HRL_GOAL_SIZE), dtype=jnp.float32)
    states = jax.random.normal(k_s, (B, STATE_DIM), dtype=jnp.float32)
    out = jax.block_until_ready(
        actor_forward(goals, states, params, input_dtype=jnp.float32, force_pallas=True))
    ref = reference_forward(goals, states, params)
    assert out.shape == (B, 2 * ACTION_SIZE)
    assert jnp.allclose(out, ref, atol=1e-4, rtol=1e-4)

    # --- larger batch: exercises the 2-step parallel batch grid, default bf16 operands ---
    B2 = 2048
    k_g2, k_s2 = jax.random.split(k_g)
    goals2 = jax.random.normal(k_g2, (B2, HRL_GOAL_SIZE), dtype=jnp.float32)
    states2 = jax.random.normal(k_s2, (B2, STATE_DIM), dtype=jnp.float32)
    ref2 = reference_forward(goals2, states2, params)

    out2_bf16 = jax.block_until_ready(actor_forward(goals2, states2, params))
    assert out2_bf16.shape == (B2, 2 * ACTION_SIZE)
    assert jnp.allclose(out2_bf16, ref2, atol=5e-2, rtol=5e-2)

    out2_f32 = jax.block_until_ready(
        actor_forward(goals2, states2, params, input_dtype=jnp.float32))
    assert jnp.allclose(out2_f32, ref2, atol=1e-4, rtol=1e-4)

    # --- ragged batch (not a multiple of the tile): exercises padding + slice-off ---
    B3 = 1000
    k_g3, k_s3 = jax.random.split(k_s)
    goals3 = jax.random.normal(k_g3, (B3, HRL_GOAL_SIZE), dtype=jnp.float32)
    states3 = jax.random.normal(k_s3, (B3, STATE_DIM), dtype=jnp.float32)
    ref3 = reference_forward(goals3, states3, params)
    out3 = jax.block_until_ready(
        actor_forward(goals3, states3, params, input_dtype=jnp.float32))
    assert jnp.allclose(out3, ref3, atol=1e-4, rtol=1e-4)

    print("KERNEL_OK")
</pallas_src>

<mosaic_0001>
module attributes {stable_mosaic.version = 11 : i64} {
  func.func @actor_kernel(%arg0: i32, %arg1: memref<12x128xf32, #tpu.memory_space<vmem>>, %arg2: memref<32x12xf32, #tpu.memory_space<vmem>>, %arg3: memref<32x1xf32, #tpu.memory_space<vmem>>, %arg4: memref<4x32xf32, #tpu.memory_space<vmem>>, %arg5: memref<4x1xf32, #tpu.memory_space<vmem>>, %arg6: memref<4x1xf32, #tpu.memory_space<vmem>>, %arg7: memref<8x128xf32, #tpu.memory_space<vmem>>) attributes {dimension_semantics = [#tpu.dimension_semantics<parallel>], iteration_bounds = array<i64: 1>, scalar_prefetch = 0 : i64, scratch_operands = 0 : i64, tpu.core_type = #tpu.core_type<tc>, window_params = [{transform_indices = @transform_0, window_bounds = array<i64: 12, 128>}, {pipeline_mode = #tpu.pipeline_mode<synchronous>, transform_indices = @transform_1, window_bounds = array<i64: 32, 12>}, {pipeline_mode = #tpu.pipeline_mode<synchronous>, transform_indices = @transform_2, window_bounds = array<i64: 32, 1>}, {pipeline_mode = #tpu.pipeline_mode<synchronous>, transform_indices = @transform_3, window_bounds = array<i64: 4, 32>}, {pipeline_mode = #tpu.pipeline_mode<synchronous>, transform_indices = @transform_4, window_bounds = array<i64: 4, 1>}, {pipeline_mode = #tpu.pipeline_mode<synchronous>, transform_indices = @transform_5, window_bounds = array<i64: 4, 1>}, {transform_indices = @transform_6, window_bounds = array<i64: 8, 128>}]} {
    %c0 = arith.constant 0 : index
    %c0_0 = arith.constant 0 : index
    %0 = vector.load %arg1[%c0, %c0_0] : memref<12x128xf32, #tpu.memory_space<vmem>>, vector<12x128xf32>
    %c0_1 = arith.constant 0 : index
    %c0_2 = arith.constant 0 : index
    %1 = vector.load %arg2[%c0_1, %c0_2] : memref<32x12xf32, #tpu.memory_space<vmem>>, vector<32x12xf32>
    %cst = arith.constant dense<0.000000e+00> : vector<32x128xf32>
    %2 = tpu.matmul %1, %0, %cst {dimension_numbers = #tpu.dot_dimension_numbers<[1], [0], [0], [1], [0, 0, 1, 1], [], []>} : vector<32x12xf32>, vector<12x128xf32>, vector<32x128xf32> -> vector<32x128xf32>
    %c0_3 = arith.constant 0 : index
    %c0_4 = arith.constant 0 : index
    %3 = vector.load %arg3[%c0_3, %c0_4] : memref<32x1xf32, #tpu.memory_space<vmem>>, vector<32x1xf32>
    %4 = vector.broadcast %3 : vector<32x1xf32> to vector<32x128xf32>
    %5 = arith.addf %2, %4 : vector<32x128xf32>
    %6 = math.tanh %5 : vector<32x128xf32>
    %c0_5 = arith.constant 0 : index
    %c0_6 = arith.constant 0 : index
    %7 = vector.load %arg4[%c0_5, %c0_6] : memref<4x32xf32, #tpu.memory_space<vmem>>, vector<4x32xf32>
    %cst_7 = arith.constant dense<0.000000e+00> : vector<4x128xf32>
    %8 = tpu.matmul %7, %6, %cst_7 {dimension_numbers = #tpu.dot_dimension_numbers<[1], [0], [0], [1], [0, 0, 1, 1], [], []>} : vector<4x32xf32>, vector<32x128xf32>, vector<4x128xf32> -> vector<4x128xf32>
    %c0_8 = arith.constant 0 : index
    %c0_9 = arith.constant 0 : index
    %9 = vector.load %arg5[%c0_8, %c0_9] : memref<4x1xf32, #tpu.memory_space<vmem>>, vector<4x1xf32>
    %10 = vector.broadcast %9 : vector<4x1xf32> to vector<4x128xf32>
    %11 = arith.addf %8, %10 : vector<4x128xf32>
    %12 = math.tanh %11 : vector<4x128xf32>
    %c0_10 = arith.constant 0 : index
    %c0_11 = arith.constant 0 : index
    %13 = vector.load %arg6[%c0_10, %c0_11] : memref<4x1xf32, #tpu.memory_space<vmem>>, vector<4x1xf32>
    %14 = vector.shape_cast %13 : vector<4x1xf32> to vector<4x1xf32>
    %15 = vector.broadcast %14 : vector<4x1xf32> to vector<4x128xf32>
    %16 = tpu.concatenate %12, %15 in 0 : vector<4x128xf32>, vector<4x128xf32> -> vector<8x128xf32>
    %c0_12 = arith.constant 0 : index
    %c0_13 = arith.constant 0 : index
    %17 = vector.load %arg7[%c0_12, %c0_13] : memref<8x128xf32, #tpu.memory_space<vmem>>, vector<8x128xf32>
    tpu.vector_store %arg7[%c0_12, %c0_13], %16 {strides = array<i32>} : memref<8x128xf32, #tpu.memory_space<vmem>>, vector<8x128xf32>,
    return
  }
  func.func @transform_0(%arg0: i32) -> (i32, i32) {
    %c0_i32 = arith.constant 0 : i32
    %c0_i32_0 = arith.constant 0 : i32
    return %c0_i32, %arg0 : i32, i32
  }
  func.func @transform_1(%arg0: i32) -> (i32, i32) {
    %c0_i32 = arith.constant 0 : i32
    %c0_i32_0 = arith.constant 0 : i32
    %c0_i32_1 = arith.constant 0 : i32
    return %c0_i32, %c0_i32_0 : i32, i32
  }
  func.func @transform_2(%arg0: i32) -> (i32, i32) {
    %c0_i32 = arith.constant 0 : i32
    %c0_i32_0 = arith.constant 0 : i32
    %c0_i32_1 = arith.constant 0 : i32
    return %c0_i32, %c0_i32_0 : i32, i32
  }
  func.func @transform_3(%arg0: i32) -> (i32, i32) {
    %c0_i32 = arith.constant 0 : i32
    %c0_i32_0 = arith.constant 0 : i32
    %c0_i32_1 = arith.constant 0 : i32
    return %c0_i32, %c0_i32_0 : i32, i32
  }
  func.func @transform_4(%arg0: i32) -> (i32, i32) {
    %c0_i32 = arith.constant 0 : i32
    %c0_i32_0 = arith.constant 0 : i32
    %c0_i32_1 = arith.constant 0 : i32
    return %c0_i32, %c0_i32_0 : i32, i32
  }
  func.func @transform_5(%arg0: i32) -> (i32, i32) {
    %c0_i32 = arith.constant 0 : i32
    %c0_i32_0 = arith.constant 0 : i32
    %c0_i32_1 = arith.constant 0 : i32
    return %c0_i32, %c0_i32_0 : i32, i32
  }
  func.func @transform_6(%arg0: i32) -> (i32, i32) {
    %c0_i32 = arith.constant 0 : i32
    %c0_i32_0 = arith.constant 0 : i32
    return %c0_i32, %arg0 : i32, i32
  }
}

</mosaic_0001>

<llo_original>
// kernel: actor_forward.1
$region0: #{actor_forward.1}
  #allocation0 [shape = 'u32[]', space=smem, size = 0x4, offset = 0x4, fixed_abs, tag = 'smem constant byte address 0x4 - core index']
  #allocation1 [shape = 'u32[72,128]{1,0:T(1,128)}', space=vmem, size = 0x9000, scoped, tag = 'internal scratch']
  %s0 = inlined_call_operand.vmem [shape: f32[12,128], index: 0, kind: input, shape index: {}]
  %s1 = inlined_call_operand.vmem [shape: f32[32,12], index: 1, kind: input, shape index: {}]
  %s2 = inlined_call_operand.vmem [shape: f32[32,1], index: 2, kind: input, shape index: {}]
  %s3 = inlined_call_operand.vmem [shape: f32[4,32], index: 3, kind: input, shape index: {}]
  %s4 = inlined_call_operand.vmem [shape: f32[4,1], index: 4, kind: input, shape index: {}]
  %s5 = inlined_call_operand.vmem [shape: f32[4,1], index: 5, kind: input, shape index: {}]
  %s6 = inlined_call_operand.vmem [shape: f32[8,128], index: 6, kind: output, shape index: {}]
  %s7 = sld [smem:[#allocation0]]
  $region34: #{actor_forward.1} parent=0
    _
  %s9 = ssub.s32 1, %s7
  %s10 = scalar_select 0, %s9, %s7
  // Predicated region
  $region2: #{actor_forward.1} parent=0 // pred_check
    _
  $region3: #{actor_forward.1} parent=0 // pred_check_branch
    %12 = sbr.rel (0) target = $region5
  $region4: #{actor_forward.1} parent=0 // pred_region
    _
  $region5: #{actor_forward.1} parent=0 // pred_fallthru
    _
  // Predicated region
  $region6: #{actor_forward.1} parent=0 // pred_check
    _
  $region7: #{actor_forward.1} parent=0 // pred_check_branch
    %14 = sbr.rel (0) target = $region9
  $region8: #{actor_forward.1} parent=0 // pred_region
    _
  $region9: #{actor_forward.1} parent=0 // pred_fallthru
    _
  // Predicated region
  $region10: #{actor_forward.1} parent=0 // pred_check
    _
  $region11: #{actor_forward.1} parent=0 // pred_check_branch
    %16 = sbr.rel (0) target = $region13
  $region12: #{actor_forward.1} parent=0 // pred_region
    _
  $region13: #{actor_forward.1} parent=0 // pred_fallthru
    _
  // Predicated region
  $region14: #{actor_forward.1} parent=0 // pred_check
    _
  $region15: #{actor_forward.1} parent=0 // pred_check_branch
    %18 = sbr.rel (0) target = $region17
  $region16: #{actor_forward.1} parent=0 // pred_region
    _
  $region17: #{actor_forward.1} parent=0 // pred_fallthru
    _
  // Predicated region
  $region18: #{actor_forward.1} parent=0 // pred_check
    _
  $region19: #{actor_forward.1} parent=0 // pred_check_branch
    %20 = sbr.rel (0) target = $region21
  $region20: #{actor_forward.1} parent=0 // pred_region
    _
  $region21: #{actor_forward.1} parent=0 // pred_fallthru
    _
  // Predicated region
  $region22: #{actor_forward.1} parent=0 // pred_check
    _
  $region23: #{actor_forward.1} parent=0 // pred_check_branch
    %22 = sbr.rel (0) target = $region25
  $region24: #{actor_forward.1} parent=0 // pred_region
    _
  $region25: #{actor_forward.1} parent=0 // pred_fallthru
    _
  %v23 = vld [vmem:[%s0] sm:$0xff]
  %v24 = vld [vmem:[%s0 + $0x8] sm:$0xf]
  %v25 = vld [vmem:[%s1] sm:$0xff]
  %v26 = vld [vmem:[%s1 + $0x8] sm:$0xff]
  %v27 = vld [vmem:[%s1 + $0x10] sm:$0xff]
  %v28 = vld [vmem:[%s1 + $0x18] sm:$0xff]
  %v29 = vld [vmem:[%s2] sm:$0xff]
  %v30 = vld [vmem:[%s2 + $0x8] sm:$0xff]
  %v31 = vld [vmem:[%s2 + $0x10] sm:$0xff]
  %v32 = vld [vmem:[%s2 + $0x18] sm:$0xff]
  %34 = vset.pattern.permute.xlu0 0
  %35 = vperm.xlu0 %34, %v29
  %v36 = vpop.permute.xlu0 %35
  %39 = vset.pattern.permute.xlu0 0
  %40 = vperm.xlu0 %39, %v30
  %v41 = vpop.permute.xlu0 %40
  %44 = vset.pattern.permute.xlu0 0
  %45 = vperm.xlu0 %44, %v31
  %v46 = vpop.permute.xlu0 %45
  %49 = vset.pattern.permute.xlu0 0
  %50 = vperm.xlu0 %49, %v32
  %v51 = vpop.permute.xlu0 %50
  %vm53 = vcmask 97280
  %v55 = vsel %vm53, %v25, 0
  %v58 = vsel %vm53, %v26, 0
  %v61 = vsel %vm53, %v27, 0
  %v64 = vsel %vm53, %v28, 0
  %vm66 = vcmask 1043456
  %v68 = vsel %vm66, %v24, 0
  %70 = vmatpush.msra.mxu0 0.0
  %71 = vmatpush.msra.mxu0 0.0
  %72 = vmatpush.msra.mxu0 0.0
  %73 = vmatpush.msra.mxu0 0.0
  %74 = vmatpush.msra.mxu0 0.0
  %75 = vmatpush.msra.mxu0 0.0
  %76 = vmatpush.msra.mxu0 0.0
  %77 = vmatpush.msra.mxu0 0.0
  %78 = vmatpush.msra.mxu0 0.0
  %79 = vmatpush.msra.mxu0 0.0
  %80 = vmatpush.msra.mxu0 0.0
  %81 = vmatpush.msra.mxu0 0.0
  %82 = vmatpush.msra.mxu0 0.0
  %83 = vmatpush.msra.mxu0 0.0
  %84 = vmatpush.msra.mxu0 %v68
  %85 = vmatpush.msra.mxu0 %v23
  %86 = vmatmul.f32.gmra.mxu0 %v55
  %v87 = vpop.f32.mrf.mxu0
  %v88 = vadd.f32 %v36, %v87
  %89 = vmatmul.f32.gmra.mxu0 %v58
  %v90 = vpop.f32.mrf.mxu0
  %v91 = vadd.f32 %v41, %v90
  %92 = vmatmul.f32.gmra.mxu0 %v61
  %v93 = vpop.f32.mrf.mxu0
  %v94 = vadd.f32 %v46, %v93
  %95 = vmatmul.f32.gmra.mxu0 %v64
  %v96 = vpop.f32.mrf.mxu0
  %v97 = vadd.f32 %v51, %v96
  %98 = vdwg.mxu0
  %v99 = vtanh.pop %v88
  %v100 = vtanh.pop %v91
  %v101 = vtanh.pop %v94
  %v102 = vtanh.pop %v97
  %v103 = vld [vmem:[%s3] sm:$0xf]
  %v104 = vld [vmem:[%s4] sm:$0xf]
  %106 = vset.pattern.permute.xlu0 0
  %107 = vperm.xlu0 %106, %v104
  %v108 = vpop.permute.xlu0 %107
  %vm110 = vcmask 261120
  %v112 = vsel %vm110, %v103, 0
  %114 = vmatpush.msra.mxu0 0.0
  %115 = vmatpush.msra.mxu0 0.0
  %116 = vmatpush.msra.mxu0 0.0
  %117 = vmatpush.msra.mxu0 0.0
  %118 = vmatpush.msra.mxu0 0.0
  %119 = vmatpush.msra.mxu0 0.0
  %120 = vmatpush.msra.mxu0 0.0
  %121 = vmatpush.msra.mxu0 0.0
  %122 = vmatpush.msra.mxu0 0.0
  %123 = vmatpush.msra.mxu0 0.0
  %124 = vmatpush.msra.mxu0 0.0
  %125 = vmatpush.msra.mxu0 0.0
  %126 = vmatpush.msra.mxu0 %v102
  %127 = vmatpush.msra.mxu0 %v101
  %128 = vmatpush.msra.mxu0 %v100
  %129 = vmatpush.msra.mxu0 %v99
  %130 = vmatmul.f32.gmra.mxu0 %v112
  %v131 = vpop.f32.mrf.mxu0
  %v132 = vadd.f32 %v108, %v131
  %133 = vdwg.mxu0
  %v134 = vtanh.pop %v132
  %v135 = vld [vmem:[%s5] sm:$0xf]
  %137 = vset.pattern.permute.xlu0 0
  %138 = vperm.xlu0 %137, %v135
  %v139 = vpop.permute.xlu0 %138
  %v140 = vrot.slane %v139, 4
  %v142 = vsel %vm66, %v134, %v140
  %143 = vst [vmem:[%s6] sm:$0xff] %v142
  // Predicated region
  $region26: #{actor_forward.1} parent=0 // pred_check
    _
  $region27: #{actor_forward.1} parent=0 // pred_check_branch
    %145 = sbr.rel (0) target = $region29
  $region28: #{actor_forward.1} parent=0 // pred_region
    _
  $region29: #{actor_forward.1} parent=0 // pred_fallthru
    _
  // Predicated region
  $region30: #{actor_forward.1} parent=0 // pred_check
    _
  $region31: #{actor_forward.1} parent=0 // pred_check_branch
    %147 = sbr.rel (0) target = $region33
  $region32: #{actor_forward.1} parent=0 // pred_region
    _
  $region33: #{actor_forward.1} parent=0 // pred_fallthru
    _

</llo_original>
